<compile_context>
chip_gen: v7x
topology: tpu7x:2x2x1
jax: 0.10.0
libtpu: 0.0.40
codegen_flags: <defaults>
</compile_context>

<pallas_src>
import functools

import numpy as np
import jax
import jax.numpy as jnp
from jax import lax
from jax.experimental import pallas as pl
from jax.experimental.pallas import tpu as pltpu

POOL = 8  # `n` in the PyTorch module


def _bilinear_matrix(out_size: int, in_size: int, scale: int) -> np.ndarray:
    """1-D bilinear interpolation matrix matching PyTorch Upsample(align_corners=False)."""
    i = np.arange(out_size, dtype=np.float64)
    src = (i + 0.5) / scale - 0.5
    src = np.maximum(src, 0.0)
    i0 = np.floor(src).astype(np.int64)
    i0 = np.minimum(i0, in_size - 1)
    i1 = np.minimum(i0 + 1, in_size - 1)
    frac = (src - i0).astype(np.float32)
    u = np.zeros((out_size, in_size), dtype=np.float32)
    u[np.arange(out_size), i0] += (1.0 - frac)
    u[np.arange(out_size), i1] += frac
    return u


def _self_attention_kernel(x_ref, w_ref, b_ref, u_ref, o_ref, *, P, K, Cf, Cg):
    # x_ref: (1, P*K, C)   w_ref: (C, Cf+Cg+C)   b_ref: (1, Cf+Cg+C)
    # u_ref: (P, W*H) bf16   o_ref: (1, C, W*H)
    xb = x_ref[0]                                                     # (P*K, C)

    # Fused f/g/h 1x1 convolutions: one MXU matmul over every pixel of the batch.
    # Bias is deferred until after the max-pool (exact: bias is per-channel const).
    proj = jnp.dot(xb, w_ref[...],
                   preferred_element_type=jnp.float32)                # (P*K, Ct)

    # MaxPool2d(8, stride=8): the K=64 window offsets are contiguous rows per
    # pooled position -> free reshape + sublane-direction max (f32 on the VPU),
    # then the (cheap) per-channel bias add on the P pooled rows only.
    ct = proj.shape[-1]
    pooled = jnp.max(proj.reshape(P, K, ct), axis=1) + b_ref[...]     # (P, Ct)

    f = pooled[:, :Cf]                                                # (P, Cf)
    g = pooled[:, Cf:Cf + Cg]                                         # (P, Cg)
    h = pooled[:, Cf + Cg:]                                           # (P, C)

    # attn_t[j, i] = sum_c g[j, c] * f[i, c]   (== attention[i, j] in torch code)
    attn_t = lax.dot_general(g, f, (((1,), (1,)), ((), ())),
                             preferred_element_type=jnp.float32)      # (P, P)
    # torch softmax over dim=-1 (index j) -> softmax over axis 0 (sublanes) here.
    attn_t = attn_t - jnp.max(attn_t, axis=0, keepdims=True)
    e = jnp.exp(attn_t)
    attn_t = e * pl.reciprocal(jnp.sum(e, axis=0, keepdims=True), approx=True)

    # s[j, c] = sum_i attention[i, j] * h[i, c]   (== bmm(h, attention))
    s = jnp.dot(attn_t, h, preferred_element_type=jnp.float32)        # (P, C)

    # Bilinear upsample as the final lane-dense matmul:
    #   out[c, w*H + h] = sum_p u2[w*H + h, p] * s[p, c]
    out = lax.dot_general(s.astype(u_ref.dtype), u_ref[...],
                          (((0,), (0,)), ((), ())),
                          preferred_element_type=jnp.float32)         # (C, W*H)
    o_ref[0] = out.astype(o_ref.dtype)


def self_attention_pallas(x, wf, bf, wg, bg, wh, bh):
    B, C, W, H = x.shape
    assert W % POOL == 0 and H % POOL == 0
    Wp, Hp = W // POOL, H // POOL
    P = Wp * Hp
    K = POOL * POOL
    Cf, Cg, Ch = wf.shape[0], wg.shape[0], wh.shape[0]
    Ct = Cf + Cg + Ch

    # NCHW -> (B, P*K, C): row index p*K + k with p = wp*Hp + hp, k = i*8 + j.
    # (Cheap input-side glue on a C=in_dim tensor; the output side needs no
    # transpose because the kernel emits channel-major NCHW directly.)
    x_r = x.reshape(B, C, Wp, POOL, Hp, POOL).transpose(0, 2, 4, 3, 5, 1)
    x_r = x_r.reshape(B, P * K, C).astype(jnp.float32)

    # Fused 1x1-conv weights / biases, laid out for x @ W.
    w_fgh = jnp.concatenate([wf.T, wg.T, wh.T], axis=1).astype(jnp.float32)    # (C, Ct)
    b_fgh = jnp.concatenate([bf, bg, bh]).reshape(1, Ct).astype(jnp.float32)   # (1, Ct)

    # Dense bilinear-upsample matrix, transposed so the final matmul is
    # (C, P) x (P, W*H) -> lane-dense (C, W*H).  Entries are multiples of 1/256
    # in [0, 1], so bf16 storage is exact and halves the biggest VMEM buffer.
    uw = _bilinear_matrix(W, Wp, POOL)
    uh = _bilinear_matrix(H, Hp, POOL)
    u2t = jnp.asarray(np.kron(uw, uh).T, dtype=jnp.bfloat16)                   # (P, W*H)

    kernel = functools.partial(_self_attention_kernel, P=P, K=K, Cf=Cf, Cg=Cg)
    out = pl.pallas_call(
        kernel,
        out_shape=jax.ShapeDtypeStruct((B, C, W * H), jnp.float32),
        grid_spec=pltpu.PrefetchScalarGridSpec(
            num_scalar_prefetch=0,
            grid=(B,),
            in_specs=[
                pl.BlockSpec((1, P * K, C), lambda b: (b, 0, 0)),
                pl.BlockSpec((C, Ct), lambda b: (0, 0)),
                pl.BlockSpec((1, Ct), lambda b: (0, 0)),
                pl.BlockSpec((P, W * H), lambda b: (0, 0)),
            ],
            out_specs=pl.BlockSpec((1, C, W * H), lambda b: (b, 0, 0)),
        ),
        compiler_params=pltpu.CompilerParams(
            dimension_semantics=("parallel",)),   # B >= 2 feeds both v7x cores
    )(x_r, w_fgh, b_fgh, u2t)

    # Already channel-major: (B, C, W*H) -> NCHW is a free reshape (no transpose).
    return out.reshape(B, C, W, H)


def self_attention_reference(x, wf, bf, wg, bg, wh, bh):
    """Pure-JAX reference mirroring the PyTorch forward (f32, HIGHEST precision)."""
    B, C, W, H = x.shape
    Wp, Hp = W // POOL, H // POOL
    P = Wp * Hp
    hi = lax.Precision.HIGHEST

    def conv(w, b):
        return jnp.einsum('bchw,oc->bohw', x, w, precision=hi) + b[None, :, None, None]

    def pool(y):
        o = y.shape[1]
        return y.reshape(B, o, Wp, POOL, Hp, POOL).max(axis=(3, 5)).reshape(B, o, P)

    f = pool(conv(wf, bf))
    g = pool(conv(wg, bg))
    h = pool(conv(wh, bh))
    attn = jnp.einsum('bcp,bcq->bpq', f, g, precision=hi)
    attn = jax.nn.softmax(attn, axis=-1)
    s = jnp.einsum('bcq,bqp->bcp', h, attn, precision=hi).reshape(B, C, Wp, Hp)
    uw = jnp.asarray(_bilinear_matrix(W, Wp, POOL))
    uh = jnp.asarray(_bilinear_matrix(H, Hp, POOL))
    return jnp.einsum('wW,bcWH,hH->bcwh', uw, s, uh, precision=hi)


if __name__ == "__main__":
    B, C, W, H = 2, 3, 16, 16   # in_dim=3 (module default), 16x16 spatial
    Cf = C // 3

    key = jax.random.PRNGKey(0)
    kx, k1, k2, k3, k4, k5, k6 = jax.random.split(key, 7)
    x = jax.random.normal(kx, (B, C, W, H), dtype=jnp.float32)
    wf = 0.5 * jax.random.normal(k1, (Cf, C), dtype=jnp.float32)
    bf = 0.1 * jax.random.normal(k2, (Cf,), dtype=jnp.float32)
    wg = 0.5 * jax.random.normal(k3, (Cf, C), dtype=jnp.float32)
    bg = 0.1 * jax.random.normal(k4, (Cf,), dtype=jnp.float32)
    wh = 0.5 * jax.random.normal(k5, (C, C), dtype=jnp.float32)
    bh = 0.1 * jax.random.normal(k6, (C,), dtype=jnp.float32)

    out = jax.block_until_ready(self_attention_pallas(x, wf, bf, wg, bg, wh, bh))
    ref = jax.block_until_ready(self_attention_reference(x, wf, bf, wg, bg, wh, bh))

    assert out.shape == (B, C, W, H)
    # Tolerance sized for single-pass bf16 MXU matmuls (Precision.DEFAULT) against
    # the f32/HIGHEST reference; layout/indexing bugs would produce O(1) errors
    # and still fail this check.
    np.testing.assert_allclose(np.asarray(out), np.asarray(ref), atol=5e-2, rtol=2e-2)
    print("KERNEL_OK")
</pallas_src>

<mosaic_0001>
module attributes {stable_mosaic.version = 11 : i64} {
  func.func @_self_attention_kernel(%arg0: i32, %arg1: memref<1x256x3xf32, #tpu.memory_space<vmem>>, %arg2: memref<3x5xf32, #tpu.memory_space<vmem>>, %arg3: memref<1x5xf32, #tpu.memory_space<vmem>>, %arg4: memref<4x256xbf16, #tpu.memory_space<vmem>>, %arg5: memref<1x3x256xf32, #tpu.memory_space<vmem>>) attributes {dimension_semantics = [#tpu.dimension_semantics<parallel>], iteration_bounds = array<i64: 2>, scalar_prefetch = 0 : i64, scratch_operands = 0 : i64, tpu.core_type = #tpu.core_type<tc>, window_params = [{transform_indices = @transform_0, window_bounds = array<i64: 1, 256, 3>}, {pipeline_mode = #tpu.pipeline_mode<synchronous>, transform_indices = @transform_1, window_bounds = array<i64: 3, 5>}, {pipeline_mode = #tpu.pipeline_mode<synchronous>, transform_indices = @transform_2, window_bounds = array<i64: 1, 5>}, {pipeline_mode = #tpu.pipeline_mode<synchronous>, transform_indices = @transform_3, window_bounds = array<i64: 4, 256>}, {transform_indices = @transform_4, window_bounds = array<i64: 1, 3, 256>}]} {
    %c0 = arith.constant 0 : index
    %c0_0 = arith.constant 0 : index
    %c0_1 = arith.constant 0 : index
    %0 = vector.load %arg1[%c0, %c0_0, %c0_1] : memref<1x256x3xf32, #tpu.memory_space<vmem>>, vector<1x256x3xf32>
    %1 = vector.shape_cast %0 : vector<1x256x3xf32> to vector<256x3xf32>
    %c0_2 = arith.constant 0 : index
    %c0_3 = arith.constant 0 : index
    %2 = vector.load %arg2[%c0_2, %c0_3] : memref<3x5xf32, #tpu.memory_space<vmem>>, vector<3x5xf32>
    %cst = arith.constant dense<0.000000e+00> : vector<256x5xf32>
    %3 = tpu.matmul %1, %2, %cst {dimension_numbers = #tpu.dot_dimension_numbers<[1], [0], [0], [1], [0, 0, 1, 1], [], []>} : vector<256x3xf32>, vector<3x5xf32>, vector<256x5xf32> -> vector<256x5xf32>
    %4 = vector.shape_cast %3 : vector<256x5xf32> to vector<4x64x5xf32>
    %cst_4 = arith.constant dense<0xFF800000> : vector<4x5xf32>
    %5 = vector.multi_reduction <maximumf>, %4, %cst_4 [1] : vector<4x64x5xf32> to vector<4x5xf32>
    %c0_5 = arith.constant 0 : index
    %c0_6 = arith.constant 0 : index
    %6 = vector.load %arg3[%c0_5, %c0_6] : memref<1x5xf32, #tpu.memory_space<vmem>>, vector<1x5xf32>
    %7 = vector.broadcast %6 : vector<1x5xf32> to vector<4x5xf32>
    %8 = arith.addf %5, %7 : vector<4x5xf32>
    %9 = vector.extract_strided_slice %8 {offsets = [0, 0], sizes = [4, 1], strides = [1, 1]} : vector<4x5xf32> to vector<4x1xf32>
    %10 = vector.extract_strided_slice %8 {offsets = [0, 1], sizes = [4, 1], strides = [1, 1]} : vector<4x5xf32> to vector<4x1xf32>
    %11 = vector.extract_strided_slice %8 {offsets = [0, 2], sizes = [4, 3], strides = [1, 1]} : vector<4x5xf32> to vector<4x3xf32>
    %cst_7 = arith.constant dense<0.000000e+00> : vector<4x4xf32>
    %12 = tpu.matmul %10, %9, %cst_7 {dimension_numbers = #tpu.dot_dimension_numbers<[1], [1], [0], [0], [0, 0, 1, 0], [], []>} : vector<4x1xf32>, vector<4x1xf32>, vector<4x4xf32> -> vector<4x4xf32>
    %cst_8 = arith.constant dense<0xFF800000> : vector<4xf32>
    %13 = vector.multi_reduction <maximumf>, %12, %cst_8 [0] : vector<4x4xf32> to vector<4xf32>
    %14 = vector.shape_cast %13 : vector<4xf32> to vector<1x4xf32>
    %15 = vector.broadcast %14 : vector<1x4xf32> to vector<4x4xf32>
    %16 = arith.subf %12, %15 : vector<4x4xf32>
    %17 = math.exp %16 : vector<4x4xf32>
    %cst_9 = arith.constant dense<0.000000e+00> : vector<4xf32>
    %18 = vector.multi_reduction <add>, %17, %cst_9 [0] : vector<4x4xf32> to vector<4xf32>
    %19 = vector.shape_cast %18 : vector<4xf32> to vector<1x4xf32>
    %20 = tpu.reciprocal %19 {approx = true} : vector<1x4xf32> -> vector<1x4xf32>
    %21 = vector.broadcast %20 : vector<1x4xf32> to vector<4x4xf32>
    %22 = arith.mulf %17, %21 : vector<4x4xf32>
    %cst_10 = arith.constant dense<0.000000e+00> : vector<4x3xf32>
    %23 = tpu.matmul %22, %11, %cst_10 {dimension_numbers = #tpu.dot_dimension_numbers<[1], [0], [0], [1], [0, 0, 1, 1], [], []>} : vector<4x4xf32>, vector<4x3xf32>, vector<4x3xf32> -> vector<4x3xf32>
    %24 = arith.truncf %23 : vector<4x3xf32> to vector<4x3xbf16>
    %c0_11 = arith.constant 0 : index
    %c0_12 = arith.constant 0 : index
    %25 = vector.load %arg4[%c0_11, %c0_12] : memref<4x256xbf16, #tpu.memory_space<vmem>>, vector<4x256xbf16>
    %cst_13 = arith.constant dense<0.000000e+00> : vector<3x256xf32>
    %26 = tpu.matmul %24, %25, %cst_13 {dimension_numbers = #tpu.dot_dimension_numbers<[0], [0], [1], [1], [0, 1, 1, 1], [], []>} : vector<4x3xbf16>, vector<4x256xbf16>, vector<3x256xf32> -> vector<3x256xf32>
    %c0_14 = arith.constant 0 : index
    %c0_15 = arith.constant 0 : index
    %c0_16 = arith.constant 0 : index
    %27 = vector.load %arg5[%c0_14, %c0_15, %c0_16] : memref<1x3x256xf32, #tpu.memory_space<vmem>>, vector<1x3x256xf32>
    %28 = vector.shape_cast %27 : vector<1x3x256xf32> to vector<3x256xf32>
    %29 = vector.shape_cast %26 : vector<3x256xf32> to vector<1x3x256xf32>
    tpu.vector_store %arg5[%c0_14, %c0_15, %c0_16], %29 {strides = array<i32>} : memref<1x3x256xf32, #tpu.memory_space<vmem>>, vector<1x3x256xf32>,
    return
  }
  func.func @transform_0(%arg0: i32) -> (i32, i32, i32) {
    %c0_i32 = arith.constant 0 : i32
    %c0_i32_0 = arith.constant 0 : i32
    %c0_i32_1 = arith.constant 0 : i32
    return %arg0, %c0_i32, %c0_i32_0 : i32, i32, i32
  }
  func.func @transform_1(%arg0: i32) -> (i32, i32) {
    %c0_i32 = arith.constant 0 : i32
    %c0_i32_0 = arith.constant 0 : i32
    %c0_i32_1 = arith.constant 0 : i32
    return %c0_i32, %c0_i32_0 : i32, i32
  }
  func.func @transform_2(%arg0: i32) -> (i32, i32) {
    %c0_i32 = arith.constant 0 : i32
    %c0_i32_0 = arith.constant 0 : i32
    %c0_i32_1 = arith.constant 0 : i32
    return %c0_i32, %c0_i32_0 : i32, i32
  }
  func.func @transform_3(%arg0: i32) -> (i32, i32) {
    %c0_i32 = arith.constant 0 : i32
    %c0_i32_0 = arith.constant 0 : i32
    %c0_i32_1 = arith.constant 0 : i32
    return %c0_i32, %c0_i32_0 : i32, i32
  }
  func.func @transform_4(%arg0: i32) -> (i32, i32, i32) {
    %c0_i32 = arith.constant 0 : i32
    %c0_i32_0 = arith.constant 0 : i32
    %c0_i32_1 = arith.constant 0 : i32
    return %arg0, %c0_i32, %c0_i32_0 : i32, i32, i32
  }
}

</mosaic_0001>

<llo_original>
// kernel: tpu_custom_call.1
$region0: #{tpu_custom_call.1}
  #allocation0 [shape = 'u32[]', space=smem, size = 0x4, offset = 0x4, fixed_abs, tag = 'smem constant byte address 0x4 - core index']
  #allocation1 [shape = 'u32[144,128]{1,0:T(1,128)}', space=vmem, size = 0x12000, scoped, tag = 'internal scratch']
  %s0 = inlined_call_operand.vmem [shape: f32[2,256,3], index: 0, kind: input, shape index: {}]
  %s1 = inlined_call_operand.vmem [shape: f32[3,5], index: 1, kind: input, shape index: {}]
  %s2 = inlined_call_operand.vmem [shape: f32[1,5], index: 2, kind: input, shape index: {}]
  %s3 = inlined_call_operand.vmem [shape: bf16[4,256], index: 3, kind: input, shape index: {}]
  %s4 = inlined_call_operand.vmem [shape: f32[2,3,256], index: 4, kind: output, shape index: {}]
  %s5 = sld [smem:[#allocation0]]
  $region49: #{tpu_custom_call.1} parent=0
    _
  %s7 = ssub.s32 1, %s5
  %s8 = scalar_select 0, %s7, %s5
  loop: start=0, step=1, limit=4
  $region2: #{tpu_custom_call.1} parent=0 // loop_pre_header
    _
  $region3: #{tpu_custom_call.1} parent=0 // loop_header
    %s10 = sphi 0, %s14
    %p11 = scmp.ge.s32.totalorder %s10, 4
    %s20 = sphi 0, %s22
    %s23 = sphi 0, %s20
    %s24 = sphi 0, %s23
    %s40 = sphi 0, %s24
    %s44 = sphi 0, %s44
    %s46 = sphi 0, %s44
    %s47 = sphi 0, %s46
    %s61 = sphi 0, %s47
    %s65 = sphi 0, %s65
    %s67 = sphi 0, %s65
    %s68 = sphi 0, %s67
    %s82 = sphi 0, %s68
    %s86 = sphi 0, %s86
    %s88 = sphi 0, %s86
    %s89 = sphi 0, %s88
    %s103 = sphi 0, %s89
    %s109 = sphi 0, %s111
    %s112 = sphi 0, %s109
    %s113 = sphi 0, %s112
    %s129 = sphi 0, %s113
  $region4: #{tpu_custom_call.1} parent=0 // loop_header_branch
    %13 = sbr.rel (%p11) target = $region8
  $region5: #{tpu_custom_call.1} parent=0 // loop_body
    %s15 = ssub.s32 %s10, 1
    %s16 = ssub.s32 %s10, 2
    %s17 = sadd.s32 %s10, 1
    %s18 = ssub.s32 %s10, %s17
    %p19 = scmp.eq.s32.totalorder %s18, 0
    %s21 = sadd.s32 %s20, 1
    %s22 = scalar_select %p19, %s20, %s21
    %p25 = pneg %p19
    %p26 = scmp.eq.s32.totalorder %s10, 1
    %p27 = por %p25, %p26
    %p28 = scmp.ne.s32.totalorder %s20, %s23
    %p29 = scmp.eq.s32.totalorder %s10, 0
    %p30 = por %p28, %p29
    %p31 = scmp.ne.s32.totalorder %s20, %s23
    %p32 = scmp.eq.s32.totalorder %s15, 1
    %p33 = por %p31, %p32
    %p34 = scmp.ne.s32.totalorder %s23, %s24
    %p35 = scmp.eq.s32.totalorder %s15, 0
    %p36 = por %p34, %p35
    %p37 = scmp.ne.s32.totalorder %s23, %s24
    %p38 = scmp.eq.s32.totalorder %s16, 1
    %p39 = por %p37, %p38
    %p41 = scmp.ne.s32.totalorder %s24, %s40
    %p42 = scmp.eq.s32.totalorder %s16, 0
    %p43 = por %p41, %p42
    %s45 = sadd.s32 %s44, 1
    %p48 = scmp.eq.s32.totalorder %s10, 1
    %p49 = scmp.ne.s32.totalorder %s44, %s46
    %p50 = scmp.eq.s32.totalorder %s10, 0
    %p51 = por %p49, %p50
    %p52 = scmp.ne.s32.totalorder %s44, %s46
    %p53 = scmp.eq.s32.totalorder %s15, 1
    %p54 = por %p52, %p53
    %p55 = scmp.ne.s32.totalorder %s46, %s47
    %p56 = scmp.eq.s32.totalorder %s15, 0
    %p57 = por %p55, %p56
    %p58 = scmp.ne.s32.totalorder %s46, %s47
    %p59 = scmp.eq.s32.totalorder %s16, 1
    %p60 = por %p58, %p59
    %p62 = scmp.ne.s32.totalorder %s47, %s61
    %p63 = scmp.eq.s32.totalorder %s16, 0
    %p64 = por %p62, %p63
    %s66 = sadd.s32 %s65, 1
    %p69 = scmp.eq.s32.totalorder %s10, 1
    %p70 = scmp.ne.s32.totalorder %s65, %s67
    %p71 = scmp.eq.s32.totalorder %s10, 0
    %p72 = por %p70, %p71
    %p73 = scmp.ne.s32.totalorder %s65, %s67
    %p74 = scmp.eq.s32.totalorder %s15, 1
    %p75 = por %p73, %p74
    %p76 = scmp.ne.s32.totalorder %s67, %s68
    %p77 = scmp.eq.s32.totalorder %s15, 0
    %p78 = por %p76, %p77
    %p79 = scmp.ne.s32.totalorder %s67, %s68
    %p80 = scmp.eq.s32.totalorder %s16, 1
    %p81 = por %p79, %p80
    %p83 = scmp.ne.s32.totalorder %s68, %s82
    %p84 = scmp.eq.s32.totalorder %s16, 0
    %p85 = por %p83, %p84
    %s87 = sadd.s32 %s86, 1
    %p90 = scmp.eq.s32.totalorder %s10, 1
    %p91 = scmp.ne.s32.totalorder %s86, %s88
    %p92 = scmp.eq.s32.totalorder %s10, 0
    %p93 = por %p91, %p92
    %p94 = scmp.ne.s32.totalorder %s86, %s88
    %p95 = scmp.eq.s32.totalorder %s15, 1
    %p96 = por %p94, %p95
    %p97 = scmp.ne.s32.totalorder %s88, %s89
    %p98 = scmp.eq.s32.totalorder %s15, 0
    %p99 = por %p97, %p98
    %p100 = scmp.ne.s32.totalorder %s88, %s89
    %p101 = scmp.eq.s32.totalorder %s16, 1
    %p102 = por %p100, %p101
    %p104 = scmp.ne.s32.totalorder %s89, %s103
    %p105 = scmp.eq.s32.totalorder %s16, 0
    %p106 = por %p104, %p105
    %s107 = ssub.s32 %s10, %s17
    %p108 = scmp.eq.s32.totalorder %s107, 0
    %s110 = sadd.s32 %s109, 1
    %s111 = scalar_select %p108, %s109, %s110
    %p114 = pneg %p108
    %p115 = scmp.eq.s32.totalorder %s10, 1
    %p116 = por %p114, %p115
    %p117 = scmp.ne.s32.totalorder %s109, %s112
    %p118 = scmp.eq.s32.totalorder %s10, 0
    %p119 = por %p117, %p118
    %p120 = scmp.ne.s32.totalorder %s109, %s112
    %p121 = scmp.eq.s32.totalorder %s15, 1
    %p122 = por %p120, %p121
    %p123 = scmp.ne.s32.totalorder %s112, %s113
    %p124 = scmp.eq.s32.totalorder %s15, 0
    %p125 = por %p123, %p124
    %p126 = scmp.ne.s32.totalorder %s112, %s113
    %p127 = scmp.eq.s32.totalorder %s16, 1
    %p128 = por %p126, %p127
    %p130 = scmp.ne.s32.totalorder %s113, %s129
    %p131 = scmp.eq.s32.totalorder %s16, 0
    %p132 = por %p130, %p131
    %p133 = scmp.le.s32.totalorder 1, %s10
    %p134 = scmp.lt.s32.totalorder %s10, 3
    %p135 = pnand %p133, %p134
    %p136 = pneg %p135
    // Predicated region
    $region9: #{tpu_custom_call.1} parent=5 // pred_check
      _
    $region10: #{tpu_custom_call.1} parent=5 // pred_check_branch
      %138 = sbr.rel (%p135) target = $region12
    $region11: #{tpu_custom_call.1} parent=5 // pred_region
      %s139 = ssub.s32 %s10, 1
      // Predicated region
      $region13: #{tpu_custom_call.1} parent=11 // pred_check
        %p140 = pneg %p57
      $region14: #{tpu_custom_call.1} parent=11 // pred_check_branch
        %142 = sbr.rel (%p140) target = $region16
      $region15: #{tpu_custom_call.1} parent=11 // pred_region
        _
      $region16: #{tpu_custom_call.1} parent=11 // pred_fallthru
        _
      // Predicated region
      $region17: #{tpu_custom_call.1} parent=11 // pred_check
        %p143 = pneg %p78
      $region18: #{tpu_custom_call.1} parent=11 // pred_check_branch
        %145 = sbr.rel (%p143) target = $region20
      $region19: #{tpu_custom_call.1} parent=11 // pred_region
        _
      $region20: #{tpu_custom_call.1} parent=11 // pred_fallthru
        _
      // Predicated region
      $region21: #{tpu_custom_call.1} parent=11 // pred_check
        %p146 = pneg %p99
      $region22: #{tpu_custom_call.1} parent=11 // pred_check_branch
        %148 = sbr.rel (%p146) target = $region24
      $region23: #{tpu_custom_call.1} parent=11 // pred_region
        _
      $region24: #{tpu_custom_call.1} parent=11 // pred_fallthru
        _
    $region12: #{tpu_custom_call.1} parent=5 // pred_fallthru
      _
    %p149 = scmp.lt.s32.totalorder %s10, 2
    // Predicated region
    $region25: #{tpu_custom_call.1} parent=5 // pred_check
      %p150 = pneg %p149
    $region26: #{tpu_custom_call.1} parent=5 // pred_check_branch
      %152 = sbr.rel (%p150) target = $region28
    $region27: #{tpu_custom_call.1} parent=5 // pred_region
      // Predicated region
      $region29: #{tpu_custom_call.1} parent=27 // pred_check
        %p153 = pneg %p30
      $region30: #{tpu_custom_call.1} parent=27 // pred_check_branch
        %155 = sbr.rel (%p153) target = $region32
      $region31: #{tpu_custom_call.1} parent=27 // pred_region
        %p156 = scmp.lt.s32.totalorder %s10, 1
        %s157 = scalar_select %p156, %s10, 1
        %s158 = smul.addr %s157, 32
        %s159 = smul.addr %s158, 8
        %s160 = scalar_lea.vmem %s0, %s159
      $region32: #{tpu_custom_call.1} parent=27 // pred_fallthru
        _
    $region28: #{tpu_custom_call.1} parent=5 // pred_fallthru
      _
    %p161 = scmp.le.s32.totalorder 1, %s10
    %p162 = scmp.lt.s32.totalorder %s10, 3
    %p163 = pnand %p161, %p162
    %p164 = pneg %p163
    // Predicated region
    $region33: #{tpu_custom_call.1} parent=5 // pred_check
      _
    $region34: #{tpu_custom_call.1} parent=5 // pred_check_branch
      %166 = sbr.rel (%p163) target = $region36
    $region35: #{tpu_custom_call.1} parent=5 // pred_region
      %s167 = ssub.s32 %s10, 1
      %p168 = scmp.lt.s32.totalorder %s15, 1
      %s169 = scalar_select %p168, %s15, 1
      %s170 = smul.addr %s169, 32
      %s171 = smul.addr %s170, 8
      %s172 = scalar_lea.vmem %s0, %s171
      %p173 = pneg %p36
      %p174 = pneg %p33
      %p175 = pneg %p57
      %p176 = pneg %p54
      %p177 = pneg %p78
      %p178 = pneg %p75
      %p179 = pneg %p99
      %p180 = pneg %p96
      %p181 = pneg %p125
      %p182 = pneg %p122
      %p183 = scmp.lt.s32.totalorder %s15, 1
      %s184 = scalar_select %p183, %s15, 1
      %s185 = smul.addr %s184, 2
      %s186 = smul.addr %s185, 4
      %s187 = scalar_lea.vmem %s4, %s186
      %p188 = scmp.lt.s32.totalorder %s15, 1
      %s189 = scalar_select %p188, %s15, 1
      %s190 = smul.addr %s189, 32
      %s191 = smul.addr %s190, 8
      %s192 = scalar_lea.vmem %s0, %s191
      %p193 = scmp.lt.s32.totalorder %s15, 1
      %s194 = scalar_select %p193, %s15, 1
      %s195 = smul.addr %s194, 2
      %s196 = smul.addr %s195, 4
      %s197 = scalar_lea.vmem %s4, %s196
      %v199 = vld [vmem:[%s192] sm:$0xff]
      %v200 = vld [vmem:[%s192 + $0x8] sm:$0xff]
      %v201 = vld [vmem:[%s192 + $0x10] sm:$0xff]
      %v202 = vld [vmem:[%s192 + $0x18] sm:$0xff]
      %v203 = vld [vmem:[%s192 + $0x20] sm:$0xff]
      %v204 = vld [vmem:[%s192 + $0x28] sm:$0xff]
      %v205 = vld [vmem:[%s192 + $0x30] sm:$0xff]
      %v206 = vld [vmem:[%s192 + $0x38] sm:$0xff]
      %v207 = vld [vmem:[%s192 + $0x40] sm:$0xff]
      %v208 = vld [vmem:[%s192 + $0x48] sm:$0xff]
      %v209 = vld [vmem:[%s192 + $0x50] sm:$0xff]
      %v210 = vld [vmem:[%s192 + $0x58] sm:$0xff]
      %v211 = vld [vmem:[%s192 + $0x60] sm:$0xff]
      %v212 = vld [vmem:[%s192 + $0x68] sm:$0xff]
      %v213 = vld [vmem:[%s192 + $0x70] sm:$0xff]
      %v214 = vld [vmem:[%s192 + $0x78] sm:$0xff]
      %v215 = vld [vmem:[%s192 + $0x80] sm:$0xff]
      %v216 = vld [vmem:[%s192 + $0x88] sm:$0xff]
      %v217 = vld [vmem:[%s192 + $0x90] sm:$0xff]
      %v218 = vld [vmem:[%s192 + $0x98] sm:$0xff]
      %v219 = vld [vmem:[%s192 + $0xa0] sm:$0xff]
      %v220 = vld [vmem:[%s192 + $0xa8] sm:$0xff]
      %v221 = vld [vmem:[%s192 + $0xb0] sm:$0xff]
      %v222 = vld [vmem:[%s192 + $0xb8] sm:$0xff]
      %v223 = vld [vmem:[%s192 + $0xc0] sm:$0xff]
      %v224 = vld [vmem:[%s192 + $0xc8] sm:$0xff]
      %v225 = vld [vmem:[%s192 + $0xd0] sm:$0xff]
      %v226 = vld [vmem:[%s192 + $0xd8] sm:$0xff]
      %v227 = vld [vmem:[%s192 + $0xe0] sm:$0xff]
      %v228 = vld [vmem:[%s192 + $0xe8] sm:$0xff]
      %v229 = vld [vmem:[%s192 + $0xf0] sm:$0xff]
      %v230 = vld [vmem:[%s192 + $0xf8] sm:$0xff]
      %v231 = vld [vmem:[%s1] sm:$0x7]
      %vm232 = vcmask 23552
      %v234 = vsel %vm232, %v199, 0
      %v237 = vsel %vm232, %v200, 0
      %v240 = vsel %vm232, %v201, 0
      %v243 = vsel %vm232, %v202, 0
      %v246 = vsel %vm232, %v203, 0
      %v249 = vsel %vm232, %v204, 0
      %v252 = vsel %vm232, %v205, 0
      %v255 = vsel %vm232, %v206, 0
      %v258 = vsel %vm232, %v207, 0
      %v261 = vsel %vm232, %v208, 0
      %v264 = vsel %vm232, %v209, 0
      %v267 = vsel %vm232, %v210, 0
      %v270 = vsel %vm232, %v211, 0
      %v273 = vsel %vm232, %v212, 0
      %v276 = vsel %vm232, %v213, 0
      %v279 = vsel %vm232, %v214, 0
      %v282 = vsel %vm232, %v215, 0
      %v285 = vsel %vm232, %v216, 0
      %v288 = vsel %vm232, %v217, 0
      %v291 = vsel %vm232, %v218, 0
      %v294 = vsel %vm232, %v219, 0
      %v297 = vsel %vm232, %v220, 0
      %v300 = vsel %vm232, %v221, 0
      %v303 = vsel %vm232, %v222, 0
      %v306 = vsel %vm232, %v223, 0
      %v309 = vsel %vm232, %v224, 0
      %v312 = vsel %vm232, %v225, 0
      %v315 = vsel %vm232, %v226, 0
      %v318 = vsel %vm232, %v227, 0
      %v321 = vsel %vm232, %v228, 0
      %v324 = vsel %vm232, %v229, 0
      %v327 = vsel %vm232, %v230, 0
      %vm329 = vcmask 1042432
      %v331 = vsel %vm329, %v231, 0
      %333 = vmatprep.subr.mxu0 0.0
      %334 = vmatpush1.msra.mxu0 %v331
      %335 = vmatprep.subr.mxu0 0.0
      %336 = vmatpush1.msra.mxu0 0.0
      %337 = vmatprep.subr.mxu0 0.0
      %338 = vmatpush1.msra.mxu0 0.0
      %339 = vmatprep.subr.mxu0 0.0
      %340 = vmatpush1.msra.mxu0 0.0
      %341 = vmatprep.subr.mxu0 0.0
      %342 = vmatpush1.msra.mxu0 0.0
      %343 = vmatprep.subr.mxu0 0.0
      %344 = vmatpush1.msra.mxu0 0.0
      %345 = vmatprep.subr.mxu0 0.0
      %346 = vmatpush1.msra.mxu0 0.0
      %347 = vmatprep.subr.mxu0 0.0
      %348 = vmatpush1.msra.mxu0 0.0
      %349 = vmatprep.subr.mxu0 0.0
      %350 = vmatpush1.msra.mxu0 0.0
      %351 = vmatprep.subr.mxu0 0.0
      %352 = vmatpush1.msra.mxu0 0.0
      %353 = vmatprep.subr.mxu0 0.0
      %354 = vmatpush1.msra.mxu0 0.0
      %355 = vmatprep.subr.mxu0 0.0
      %356 = vmatpush1.msra.mxu0 0.0
      %357 = vmatprep.subr.mxu0 0.0
      %358 = vmatpush1.msra.mxu0 0.0
      %359 = vmatprep.subr.mxu0 0.0
      %360 = vmatpush1.msra.mxu0 0.0
      %361 = vmatprep.subr.mxu0 0.0
      %362 = vmatpush1.msra.mxu0 0.0
      %363 = vmatprep.subr.mxu0 0.0
      %364 = vmatpush1.msra.mxu0 0.0
      %365 = vmatprep.subr.mxu0 0.0
      %366 = vmatpush1.msra.mxu0 0.0
      %367 = vmatprep.subr.mxu0 0.0
      %368 = vmatpush1.msra.mxu0 0.0
      %369 = vmatprep.subr.mxu0 0.0
      %370 = vmatpush1.msra.mxu0 0.0
      %371 = vmatprep.subr.mxu0 0.0
      %372 = vmatpush1.msra.mxu0 0.0
      %373 = vmatprep.subr.mxu0 0.0
      %374 = vmatpush1.msra.mxu0 0.0
      %375 = vmatprep.subr.mxu0 0.0
      %376 = vmatpush1.msra.mxu0 0.0
      %377 = vmatprep.subr.mxu0 0.0
      %378 = vmatpush1.msra.mxu0 0.0
      %379 = vmatprep.subr.mxu0 0.0
      %380 = vmatpush1.msra.mxu0 0.0
      %381 = vmatprep.subr.mxu0 0.0
      %382 = vmatpush1.msra.mxu0 0.0
      %383 = vmatprep.subr.mxu0 0.0
      %384 = vmatpush1.msra.mxu0 0.0
      %385 = vmatprep.subr.mxu0 0.0
      %386 = vmatpush1.msra.mxu0 0.0
      %387 = vmatprep.subr.mxu0 0.0
      %388 = vmatpush1.msra.mxu0 0.0
      %389 = vmatprep.subr.mxu0 0.0
      %390 = vmatpush1.msra.mxu0 0.0
      %391 = vmatprep.subr.mxu0 0.0
      %392 = vmatpush1.msra.mxu0 0.0
      %393 = vmatprep.subr.mxu0 0.0
      %394 = vmatpush1.msra.mxu0 0.0
      %395 = vmatprep.subr.mxu0 0.0
      %396 = vmatpush1.msra.mxu0 0.0
      %397 = vmatprep.mubr.f32.mxu0 0.0
      %398 = vmatmul.mubr.f32.gmra.mrb[0].mxu0 %v234
      %v399 = vpop.f32.mrb[0].mxu0
      %v400 = vadd.f32 0.0, %v399
      %v401 = vpop.f32.mrb[0].mxu0
      %402 = vmatprep.mubr.f32.mxu0 0.0
      %403 = vmatmul.mubr.f32.gmra.mrb[0].mxu0 %v237
      %v404 = vpop.f32.mrb[0].mxu0
      %v405 = vadd.f32 0.0, %v404
      %v406 = vpop.f32.mrb[0].mxu0
      %407 = vmatprep.mubr.f32.mxu0 0.0
      %408 = vmatmul.mubr.f32.gmra.mrb[0].mxu0 %v240
      %v409 = vpop.f32.mrb[0].mxu0
      %v410 = vadd.f32 0.0, %v409
      %v411 = vpop.f32.mrb[0].mxu0
      %412 = vmatprep.mubr.f32.mxu0 0.0
      %413 = vmatmul.mubr.f32.gmra.mrb[0].mxu0 %v243
      %v414 = vpop.f32.mrb[0].mxu0
      %v415 = vadd.f32 0.0, %v414
      %v416 = vpop.f32.mrb[0].mxu0
      %417 = vmatprep.mubr.f32.mxu0 0.0
      %418 = vmatmul.mubr.f32.gmra.mrb[0].mxu0 %v246
      %v419 = vpop.f32.mrb[0].mxu0
      %v420 = vadd.f32 0.0, %v419
      %v421 = vpop.f32.mrb[0].mxu0
      %422 = vmatprep.mubr.f32.mxu0 0.0
      %423 = vmatmul.mubr.f32.gmra.mrb[0].mxu0 %v249
      %v424 = vpop.f32.mrb[0].mxu0
      %v425 = vadd.f32 0.0, %v424
      %v426 = vpop.f32.mrb[0].mxu0
      %427 = vmatprep.mubr.f32.mxu0 0.0
      %428 = vmatmul.mubr.f32.gmra.mrb[0].mxu0 %v252
      %v429 = vpop.f32.mrb[0].mxu0
      %v430 = vadd.f32 0.0, %v429
      %v431 = vpop.f32.mrb[0].mxu0
      %432 = vmatprep.mubr.f32.mxu0 0.0
      %433 = vmatmul.mubr.f32.gmra.mrb[0].mxu0 %v255
      %v434 = vpop.f32.mrb[0].mxu0
      %v435 = vadd.f32 0.0, %v434
      %v436 = vpop.f32.mrb[0].mxu0
      %437 = vmatprep.mubr.f32.mxu0 0.0
      %438 = vmatmul.mubr.f32.gmra.mrb[0].mxu0 %v258
      %v439 = vpop.f32.mrb[0].mxu0
      %v440 = vadd.f32 0.0, %v439
      %v441 = vpop.f32.mrb[0].mxu0
      %442 = vmatprep.mubr.f32.mxu0 0.0
      %443 = vmatmul.mubr.f32.gmra.mrb[0].mxu0 %v261
      %v444 = vpop.f32.mrb[0].mxu0
      %v445 = vadd.f32 0.0, %v444
      %v446 = vpop.f32.mrb[0].mxu0
      %447 = vmatprep.mubr.f32.mxu0 0.0
      %448 = vmatmul.mubr.f32.gmra.mrb[0].mxu0 %v264
      %v449 = vpop.f32.mrb[0].mxu0
      %v450 = vadd.f32 0.0, %v449
      %v451 = vpop.f32.mrb[0].mxu0
      %452 = vmatprep.mubr.f32.mxu0 0.0
      %453 = vmatmul.mubr.f32.gmra.mrb[0].mxu0 %v267
      %v454 = vpop.f32.mrb[0].mxu0
      %v455 = vadd.f32 0.0, %v454
      %v456 = vpop.f32.mrb[0].mxu0
      %457 = vmatprep.mubr.f32.mxu0 0.0
      %458 = vmatmul.mubr.f32.gmra.mrb[0].mxu0 %v270
      %v459 = vpop.f32.mrb[0].mxu0
      %v460 = vadd.f32 0.0, %v459
      %v461 = vpop.f32.mrb[0].mxu0
      %462 = vmatprep.mubr.f32.mxu0 0.0
      %463 = vmatmul.mubr.f32.gmra.mrb[0].mxu0 %v273
      %v464 = vpop.f32.mrb[0].mxu0
      %v465 = vadd.f32 0.0, %v464
      %v466 = vpop.f32.mrb[0].mxu0
      %467 = vmatprep.mubr.f32.mxu0 0.0
      %468 = vmatmul.mubr.f32.gmra.mrb[0].mxu0 %v276
      %v469 = vpop.f32.mrb[0].mxu0
      %v470 = vadd.f32 0.0, %v469
      %v471 = vpop.f32.mrb[0].mxu0
      %472 = vmatprep.mubr.f32.mxu0 0.0
      %473 = vmatmul.mubr.f32.gmra.mrb[0].mxu0 %v279
      %v474 = vpop.f32.mrb[0].mxu0
      %v475 = vadd.f32 0.0, %v474
      %v476 = vpop.f32.mrb[0].mxu0
      %477 = vmatprep.mubr.f32.mxu0 0.0
      %478 = vmatmul.mubr.f32.gmra.mrb[0].mxu0 %v282
      %v479 = vpop.f32.mrb[0].mxu0
      %v480 = vadd.f32 0.0, %v479
      %v481 = vpop.f32.mrb[0].mxu0
      %482 = vmatprep.mubr.f32.mxu0 0.0
      %483 = vmatmul.mubr.f32.gmra.mrb[0].mxu0 %v285
      %v484 = vpop.f32.mrb[0].mxu0
      %v485 = vadd.f32 0.0, %v484
      %v486 = vpop.f32.mrb[0].mxu0
      %487 = vmatprep.mubr.f32.mxu0 0.0
      %488 = vmatmul.mubr.f32.gmra.mrb[0].mxu0 %v288
      %v489 = vpop.f32.mrb[0].mxu0
      %v490 = vadd.f32 0.0, %v489
      %v491 = vpop.f32.mrb[0].mxu0
      %492 = vmatprep.mubr.f32.mxu0 0.0
      %493 = vmatmul.mubr.f32.gmra.mrb[0].mxu0 %v291
      %v494 = vpop.f32.mrb[0].mxu0
      %v495 = vadd.f32 0.0, %v494
      %v496 = vpop.f32.mrb[0].mxu0
      %497 = vmatprep.mubr.f32.mxu0 0.0
      %498 = vmatmul.mubr.f32.gmra.mrb[0].mxu0 %v294
      %v499 = vpop.f32.mrb[0].mxu0
      %v500 = vadd.f32 0.0, %v499
      %v501 = vpop.f32.mrb[0].mxu0
      %502 = vmatprep.mubr.f32.mxu0 0.0
      %503 = vmatmul.mubr.f32.gmra.mrb[0].mxu0 %v297
      %v504 = vpop.f32.mrb[0].mxu0
      %v505 = vadd.f32 0.0, %v504
      %v506 = vpop.f32.mrb[0].mxu0
      %507 = vmatprep.mubr.f32.mxu0 0.0
      %508 = vmatmul.mubr.f32.gmra.mrb[0].mxu0 %v300
      %v509 = vpop.f32.mrb[0].mxu0
      %v510 = vadd.f32 0.0, %v509
      %v511 = vpop.f32.mrb[0].mxu0
      %512 = vmatprep.mubr.f32.mxu0 0.0
      %513 = vmatmul.mubr.f32.gmra.mrb[0].mxu0 %v303
      %v514 = vpop.f32.mrb[0].mxu0
      %v515 = vadd.f32 0.0, %v514
      %v516 = vpop.f32.mrb[0].mxu0
      %517 = vmatprep.mubr.f32.mxu0 0.0
      %518 = vmatmul.mubr.f32.gmra.mrb[0].mxu0 %v306
      %v519 = vpop.f32.mrb[0].mxu0
      %v520 = vadd.f32 0.0, %v519
      %v521 = vpop.f32.mrb[0].mxu0
      %522 = vmatprep.mubr.f32.mxu0 0.0
      %523 = vmatmul.mubr.f32.gmra.mrb[0].mxu0 %v309
      %v524 = vpop.f32.mrb[0].mxu0
      %v525 = vadd.f32 0.0, %v524
      %v526 = vpop.f32.mrb[0].mxu0
      %527 = vmatprep.mubr.f32.mxu0 0.0
      %528 = vmatmul.mubr.f32.gmra.mrb[0].mxu0 %v312
      %v529 = vpop.f32.mrb[0].mxu0
      %v530 = vadd.f32 0.0, %v529
      %v531 = vpop.f32.mrb[0].mxu0
      %532 = vmatprep.mubr.f32.mxu0 0.0
      %533 = vmatmul.mubr.f32.gmra.mrb[0].mxu0 %v315
      %v534 = vpop.f32.mrb[0].mxu0
      %v535 = vadd.f32 0.0, %v534
      %v536 = vpop.f32.mrb[0].mxu0
      %537 = vmatprep.mubr.f32.mxu0 0.0
      %538 = vmatmul.mubr.f32.gmra.mrb[0].mxu0 %v318
      %v539 = vpop.f32.mrb[0].mxu0
      %v540 = vadd.f32 0.0, %v539
      %v541 = vpop.f32.mrb[0].mxu0
      %542 = vmatprep.mubr.f32.mxu0 0.0
      %543 = vmatmul.mubr.f32.gmra.mrb[0].mxu0 %v321
      %v544 = vpop.f32.mrb[0].mxu0
      %v545 = vadd.f32 0.0, %v544
      %v546 = vpop.f32.mrb[0].mxu0
      %547 = vmatprep.mubr.f32.mxu0 0.0
      %548 = vmatmul.mubr.f32.gmra.mrb[0].mxu0 %v324
      %v549 = vpop.f32.mrb[0].mxu0
      %v550 = vadd.f32 0.0, %v549
      %v551 = vpop.f32.mrb[0].mxu0
      %552 = vmatprep.mubr.f32.mxu0 0.0
      %553 = vmatmul.mubr.f32.gmra.mrb[0].mxu0 %v327
      %v554 = vpop.f32.mrb[0].mxu0
      %v555 = vadd.f32 0.0, %v554
      %v556 = vpop.f32.mrb[0].mxu0
      %557 = vdwg.mxu0
      %vm558 = vcmask 39936
      %v559 = vsel %vm558, %v400, -inf
      %v560 = vsel %vm558, %v405, -inf
      %v561 = vmax.f32 %v559, %v560
      %v562 = vsel %vm558, %v410, -inf
      %v563 = vmax.f32 %v561, %v562
      %v564 = vsel %vm558, %v415, -inf
      %v565 = vmax.f32 %v563, %v564
      %v566 = vsel %vm558, %v420, -inf
      %v567 = vmax.f32 %v565, %v566
      %v568 = vsel %vm558, %v425, -inf
      %v569 = vmax.f32 %v567, %v568
      %v570 = vsel %vm558, %v430, -inf
      %v571 = vmax.f32 %v569, %v570
      %v572 = vsel %vm558, %v435, -inf
      %v573 = vmax.f32 %v571, %v572
      %v574 = vrot.slane %v573, 4
      %v575 = vmax.f32 %v573, %v574
      %v576 = vrot.slane %v575, 2
      %v577 = vmax.f32 %v575, %v576
      %v578 = vrot.slane %v577, 1
      %v579 = vmax.f32 %v577, %v578
      %v580 = vsel %vm558, %v440, -inf
      %v581 = vsel %vm558, %v445, -inf
      %v582 = vmax.f32 %v580, %v581
      %v583 = vsel %vm558, %v450, -inf
      %v584 = vmax.f32 %v582, %v583
      %v585 = vsel %vm558, %v455, -inf
      %v586 = vmax.f32 %v584, %v585
      %v587 = vsel %vm558, %v460, -inf
      %v588 = vmax.f32 %v586, %v587
      %v589 = vsel %vm558, %v465, -inf
      %v590 = vmax.f32 %v588, %v589
      %v591 = vsel %vm558, %v470, -inf
      %v592 = vmax.f32 %v590, %v591
      %v593 = vsel %vm558, %v475, -inf
      %v594 = vmax.f32 %v592, %v593
      %v595 = vrot.slane %v594, 4
      %v596 = vmax.f32 %v594, %v595
      %v597 = vrot.slane %v596, 2
      %v598 = vmax.f32 %v596, %v597
      %v599 = vrot.slane %v598, 1
      %v600 = vmax.f32 %v598, %v599
      %v601 = vsel %vm558, %v480, -inf
      %v602 = vsel %vm558, %v485, -inf
      %v603 = vmax.f32 %v601, %v602
      %v604 = vsel %vm558, %v490, -inf
      %v605 = vmax.f32 %v603, %v604
      %v606 = vsel %vm558, %v495, -inf
      %v607 = vmax.f32 %v605, %v606
      %v608 = vsel %vm558, %v500, -inf
      %v609 = vmax.f32 %v607, %v608
      %v610 = vsel %vm558, %v505, -inf
      %v611 = vmax.f32 %v609, %v610
      %v612 = vsel %vm558, %v510, -inf
      %v613 = vmax.f32 %v611, %v612
      %v614 = vsel %vm558, %v515, -inf
      %v615 = vmax.f32 %v613, %v614
      %v616 = vrot.slane %v615, 4
      %v617 = vmax.f32 %v615, %v616
      %v618 = vrot.slane %v617, 2
      %v619 = vmax.f32 %v617, %v618
      %v620 = vrot.slane %v619, 1
      %v621 = vmax.f32 %v619, %v620
      %v622 = vsel %vm558, %v520, -inf
      %v623 = vsel %vm558, %v525, -inf
      %v624 = vmax.f32 %v622, %v623
      %v625 = vsel %vm558, %v530, -inf
      %v626 = vmax.f32 %v624, %v625
      %v627 = vsel %vm558, %v535, -inf
      %v628 = vmax.f32 %v626, %v627
      %v629 = vsel %vm558, %v540, -inf
      %v630 = vmax.f32 %v628, %v629
      %v631 = vsel %vm558, %v545, -inf
      %v632 = vmax.f32 %v630, %v631
      %v633 = vsel %vm558, %v550, -inf
      %v634 = vmax.f32 %v632, %v633
      %v635 = vsel %vm558, %v555, -inf
      %v636 = vmax.f32 %v634, %v635
      %v637 = vrot.slane %v636, 4
      %v638 = vmax.f32 %v636, %v637
      %v639 = vrot.slane %v638, 2
      %v640 = vmax.f32 %v638, %v639
      %v641 = vrot.slane %v640, 1
      %v642 = vmax.f32 %v640, %v641
      %v643 = vld [vmem:[%s2] sm:$0x1]
      %v645 = vlaneseq
      %v646 = vshrl.u32 %v645, 7
      %v647 = vsub.s32 0, %v646
      %v648 = vrot.slane %v643, %v647
      %v650 = vadd.f32 %v579, %v648
      %v651 = vadd.f32 %v600, %v648
      %v652 = vadd.f32 %v621, %v648
      %v653 = vadd.f32 %v642, %v648
      %v658 = vrot.slane %v651, 7
      %vm659 = vcmask 1041409
      %v660 = vsel %vm659, %v658, %v650
      %v661 = vrot.slane %v652, 6
      %vm662 = vcmask 1042434
      %v663 = vsel %vm662, %v661, %v660
      %v664 = vrot.slane %v653, 5
      %vm665 = vcmask 1043459
      %v666 = vsel %vm665, %v664, %v663
      %667 = vrot.lane.b32.xlu0 %v666, 127
      %v668 = vpop.permute.xlu0 %667
      %vm669 = vcmask 7168
      %v670 = vsel %vm669, %v668, 0
      %v672 = vsel %vm669, %v666, 0
      %674 = vmatprep.subr.mxu0 0.0
      %675 = vmatpush1.xpose.msra.mxu0 %v672
      %676 = vmatprep.subr.mxu0 0.0
      %677 = vmatpush1.xpose.msra.mxu0 0.0
      %678 = vmatprep.subr.mxu0 0.0
      %679 = vmatpush1.xpose.msra.mxu0 0.0
      %680 = vmatprep.subr.mxu0 0.0
      %681 = vmatpush1.xpose.msra.mxu0 0.0
      %682 = vmatprep.subr.mxu0 0.0
      %683 = vmatpush1.xpose.msra.mxu0 0.0
      %684 = vmatprep.subr.mxu0 0.0
      %685 = vmatpush1.xpose.msra.mxu0 0.0
      %686 = vmatprep.subr.mxu0 0.0
      %687 = vmatpush1.xpose.msra.mxu0 0.0
      %688 = vmatprep.subr.mxu0 0.0
      %689 = vmatpush1.xpose.msra.mxu0 0.0
      %690 = vmatprep.subr.mxu0 0.0
      %691 = vmatpush1.xpose.msra.mxu0 0.0
      %692 = vmatprep.subr.mxu0 0.0
      %693 = vmatpush1.xpose.msra.mxu0 0.0
      %694 = vmatprep.subr.mxu0 0.0
      %695 = vmatpush1.xpose.msra.mxu0 0.0
      %696 = vmatprep.subr.mxu0 0.0
      %697 = vmatpush1.xpose.msra.mxu0 0.0
      %698 = vmatprep.subr.mxu0 0.0
      %699 = vmatpush1.xpose.msra.mxu0 0.0
      %700 = vmatprep.subr.mxu0 0.0
      %701 = vmatpush1.xpose.msra.mxu0 0.0
      %702 = vmatprep.subr.mxu0 0.0
      %703 = vmatpush1.xpose.msra.mxu0 0.0
      %704 = vmatprep.subr.mxu0 0.0
      %705 = vmatpush1.xpose.msra.mxu0 0.0
      %706 = vmatprep.subr.mxu0 0.0
      %707 = vmatpush1.xpose.msra.mxu0 0.0
      %708 = vmatprep.subr.mxu0 0.0
      %709 = vmatpush1.xpose.msra.mxu0 0.0
      %710 = vmatprep.subr.mxu0 0.0
      %711 = vmatpush1.xpose.msra.mxu0 0.0
      %712 = vmatprep.subr.mxu0 0.0
      %713 = vmatpush1.xpose.msra.mxu0 0.0
      %714 = vmatprep.subr.mxu0 0.0
      %715 = vmatpush1.xpose.msra.mxu0 0.0
      %716 = vmatprep.subr.mxu0 0.0
      %717 = vmatpush1.xpose.msra.mxu0 0.0
      %718 = vmatprep.subr.mxu0 0.0
      %719 = vmatpush1.xpose.msra.mxu0 0.0
      %720 = vmatprep.subr.mxu0 0.0
      %721 = vmatpush1.xpose.msra.mxu0 0.0
      %722 = vmatprep.subr.mxu0 0.0
      %723 = vmatpush1.xpose.msra.mxu0 0.0
      %724 = vmatprep.subr.mxu0 0.0
      %725 = vmatpush1.xpose.msra.mxu0 0.0
      %726 = vmatprep.subr.mxu0 0.0
      %727 = vmatpush1.xpose.msra.mxu0 0.0
      %728 = vmatprep.subr.mxu0 0.0
      %729 = vmatpush1.xpose.msra.mxu0 0.0
      %730 = vmatprep.subr.mxu0 0.0
      %731 = vmatpush1.xpose.msra.mxu0 0.0
      %732 = vmatprep.subr.mxu0 0.0
      %733 = vmatpush1.xpose.msra.mxu0 0.0
      %734 = vmatprep.subr.mxu0 0.0
      %735 = vmatpush1.xpose.msra.mxu0 0.0
      %736 = vmatprep.subr.mxu0 0.0
      %737 = vmatpush1.xpose.msra.mxu0 0.0
      %738 = vmatprep.mubr.f32.mxu0 0.0
      %739 = vmatmul.mubr.f32.gmra.mrb[0].mxu0 %v670
      %v740 = vpop.f32.mrb[0].mxu0
      %v741 = vadd.f32 0.0, %v740
      %v742 = vpop.f32.mrb[0].mxu0
      %743 = vdwg.mxu0
      %vm744 = vcmask 27648
      %v745 = vsel %vm744, %v741, -inf
      %v746 = vrot.slane %v745, 4
      %v747 = vmax.f32 %v745, %v746
      %v748 = vrot.slane %v747, 2
      %v749 = vmax.f32 %v747, %v748
      %v750 = vrot.slane %v749, 1
      %v751 = vmax.f32 %v749, %v750
      %v752 = vsub.f32 %v741, %v751
      %v753 = vmul.f32 %v752, 1.442695
      %v754 = vpow.pop %v753
      %v755 = vsel %vm744, %v754, 0.0
      %v756 = vrot.slane %v755, 4
      %v757 = vadd.f32 %v755, %v756
      %v758 = vrot.slane %v757, 2
      %v759 = vadd.f32 %v757, %v758
      %v760 = vrot.slane %v759, 1
      %v761 = vadd.f32 %v759, %v760
      %v762 = vrcp.pop %v761
      %v763 = vmul.f32 %v754, %v762
      %764 = vrot.lane.b32.xlu0 %v666, 126
      %v765 = vpop.permute.xlu0 %764
      %vm766 = vcmask 31744
      %v768 = vsel %vm766, %v763, 0
      %vm770 = vcmask 1043456
      %v771 = vsel %vm770, %v765, 0
      %773 = vmatprep.subr.mxu0 0.0
      %774 = vmatpush1.msra.mxu0 %v771
      %775 = vmatprep.subr.mxu0 0.0
      %776 = vmatpush1.msra.mxu0 0.0
      %777 = vmatprep.subr.mxu0 0.0
      %778 = vmatpush1.msra.mxu0 0.0
      %779 = vmatprep.subr.mxu0 0.0
      %780 = vmatpush1.msra.mxu0 0.0
      %781 = vmatprep.subr.mxu0 0.0
      %782 = vmatpush1.msra.mxu0 0.0
      %783 = vmatprep.subr.mxu0 0.0
      %784 = vmatpush1.msra.mxu0 0.0
      %785 = vmatprep.subr.mxu0 0.0
      %786 = vmatpush1.msra.mxu0 0.0
      %787 = vmatprep.subr.mxu0 0.0
      %788 = vmatpush1.msra.mxu0 0.0
      %789 = vmatprep.subr.mxu0 0.0
      %790 = vmatpush1.msra.mxu0 0.0
      %791 = vmatprep.subr.mxu0 0.0
      %792 = vmatpush1.msra.mxu0 0.0
      %793 = vmatprep.subr.mxu0 0.0
      %794 = vmatpush1.msra.mxu0 0.0
      %795 = vmatprep.subr.mxu0 0.0
      %796 = vmatpush1.msra.mxu0 0.0
      %797 = vmatprep.subr.mxu0 0.0
      %798 = vmatpush1.msra.mxu0 0.0
      %799 = vmatprep.subr.mxu0 0.0
      %800 = vmatpush1.msra.mxu0 0.0
      %801 = vmatprep.subr.mxu0 0.0
      %802 = vmatpush1.msra.mxu0 0.0
      %803 = vmatprep.subr.mxu0 0.0
      %804 = vmatpush1.msra.mxu0 0.0
      %805 = vmatprep.subr.mxu0 0.0
      %806 = vmatpush1.msra.mxu0 0.0
      %807 = vmatprep.subr.mxu0 0.0
      %808 = vmatpush1.msra.mxu0 0.0
      %809 = vmatprep.subr.mxu0 0.0
      %810 = vmatpush1.msra.mxu0 0.0
      %811 = vmatprep.subr.mxu0 0.0
      %812 = vmatpush1.msra.mxu0 0.0
      %813 = vmatprep.subr.mxu0 0.0
      %814 = vmatpush1.msra.mxu0 0.0
      %815 = vmatprep.subr.mxu0 0.0
      %816 = vmatpush1.msra.mxu0 0.0
      %817 = vmatprep.subr.mxu0 0.0
      %818 = vmatpush1.msra.mxu0 0.0
      %819 = vmatprep.subr.mxu0 0.0
      %820 = vmatpush1.msra.mxu0 0.0
      %821 = vmatprep.subr.mxu0 0.0
      %822 = vmatpush1.msra.mxu0 0.0
      %823 = vmatprep.subr.mxu0 0.0
      %824 = vmatpush1.msra.mxu0 0.0
      %825 = vmatprep.subr.mxu0 0.0
      %826 = vmatpush1.msra.mxu0 0.0
      %827 = vmatprep.subr.mxu0 0.0
      %828 = vmatpush1.msra.mxu0 0.0
      %829 = vmatprep.subr.mxu0 0.0
      %830 = vmatpush1.msra.mxu0 0.0
      %831 = vmatprep.subr.mxu0 0.0
      %832 = vmatpush1.msra.mxu0 0.0
      %833 = vmatprep.subr.mxu0 0.0
      %834 = vmatpush1.msra.mxu0 0.0
      %835 = vmatprep.subr.mxu0 0.0
      %836 = vmatpush1.msra.mxu0 0.0
      %837 = vmatprep.mubr.f32.mxu0 0.0
      %838 = vmatmul.mubr.f32.gmra.mrb[0].mxu0 %v768
      %v839 = vpop.f32.mrb[0].mxu0
      %v840 = vadd.f32 0.0, %v839
      %v841 = vpop.f32.mrb[0].mxu0
      %842 = vdwg.mxu0
      %v843 = vpack.c.bf16 %v840, %v840
      %v844 = vld [vmem:[%s3] sm:$0xf]
      %845 = vxpose.xlu0.c.b16.start [1/8] %v843, 128
      %846 = vxpose.xlu0.c.b16.cont [2/8] 0, 128
      %847 = vxpose.xlu0.c.b16.cont [3/8] 0, 128
      %848 = vxpose.xlu0.c.b16.cont [4/8] 0, 128
      %849 = vxpose.xlu0.c.b16.cont [5/8] 0, 128
      %850 = vxpose.xlu0.c.b16.cont [6/8] 0, 128
      %851 = vxpose.xlu0.c.b16.cont [7/8] 0, 128
      %852 = vxpose.xlu0.c.b16.end [8/8] 0, 128
      %v853 = vpop.trf.xlu0
      %v854 = vpop.trf.xlu0
      %v855 = vpop.trf.xlu0
      %v856 = vpop.trf.xlu0
      %v857 = vpop.trf.xlu0
      %v858 = vpop.trf.xlu0
      %v859 = vpop.trf.xlu0
      %v860 = vpop.trf.xlu0
      %v863 = vunpack.c.l.s4 1983009808
      %v864 = vunpack.c.0.s8 %v863
      %v865 = vlaneseq
      %v866 = vshrl.u32 %v865, 7
      %v867 = vsub.s32 %v864, %v866
      %v868 = vrot.slane %v844, %v867
      %v869 = vcombine.high %v868, %v868
      %v871 = vsel %vm766, %v853, 0
      %vm873 = vcmask 1041408
      %v875 = vsel %vm873, %v868, 0
      %v878 = vsel %vm873, %v869, 0
      %880 = vmatprep.subr.bf16.mxu0 %v878
      %881 = vmatpush1.bf16.msra.mxu0 %v875
      %882 = vmatprep.subr.bf16.mxu0 0
      %883 = vmatpush1.bf16.msra.mxu0 0
      %884 = vmatprep.subr.bf16.mxu0 0
      %885 = vmatpush1.bf16.msra.mxu0 0
      %886 = vmatprep.subr.bf16.mxu0 0
      %887 = vmatpush1.bf16.msra.mxu0 0
      %888 = vmatprep.subr.bf16.mxu0 0
      %889 = vmatpush1.bf16.msra.mxu0 0
      %890 = vmatprep.subr.bf16.mxu0 0
      %891 = vmatpush1.bf16.msra.mxu0 0
      %892 = vmatprep.subr.bf16.mxu0 0
      %893 = vmatpush1.bf16.msra.mxu0 0
      %894 = vmatprep.subr.bf16.mxu0 0
      %895 = vmatpush1.bf16.msra.mxu0 0
      %896 = vmatprep.subr.bf16.mxu0 0
      %897 = vmatpush1.bf16.msra.mxu0 0
      %898 = vmatprep.subr.bf16.mxu0 0
      %899 = vmatpush1.bf16.msra.mxu0 0
      %900 = vmatprep.subr.bf16.mxu0 0
      %901 = vmatpush1.bf16.msra.mxu0 0
      %902 = vmatprep.subr.bf16.mxu0 0
      %903 = vmatpush1.bf16.msra.mxu0 0
      %904 = vmatprep.subr.bf16.mxu0 0
      %905 = vmatpush1.bf16.msra.mxu0 0
      %906 = vmatprep.subr.bf16.mxu0 0
      %907 = vmatpush1.bf16.msra.mxu0 0
      %908 = vmatprep.subr.bf16.mxu0 0
      %909 = vmatpush1.bf16.msra.mxu0 0
      %910 = vmatprep.subr.bf16.mxu0 0
      %911 = vmatpush1.bf16.msra.mxu0 0
      %912 = vmatprep.mubr.bf16.mxu0 0
      %913 = vmatmul.mubr.bf16.gmra.mrb[0].mxu0 %v871
      %v914 = vpop.f32.mrb[0].mxu0
      %v915 = vadd.f32 0.0, %v914
      %v916 = vpop.f32.mrb[0].mxu0
      %v917 = vadd.f32 0.0, %v916
      %v918 = vpop.f32.mrb[0].mxu0
      %v919 = vpop.f32.mrb[0].mxu0
      %920 = vdwg.mxu0
      %v923 = vcombine.low %v915, %v917
      %925 = vst [vmem:[%s197] sm:$0x77] %v923
      %p926 = scmp.lt.s32.totalorder %s15, 1
      %s927 = scalar_select %p926, %s15, 1
      %s928 = smul.addr %s927, 2
      %s929 = smul.addr %s928, 4
      %s930 = scalar_lea.vmem %s4, %s929
      // Predicated region
      $region37: #{tpu_custom_call.1} parent=35 // pred_check
        %p931 = pneg %p122
      $region38: #{tpu_custom_call.1} parent=35 // pred_check_branch
        %933 = sbr.rel (%p931) target = $region40
      $region39: #{tpu_custom_call.1} parent=35 // pred_region
        _
      $region40: #{tpu_custom_call.1} parent=35 // pred_fallthru
        _
    $region36: #{tpu_custom_call.1} parent=5 // pred_fallthru
      _
    %p934 = scmp.le.s32.totalorder 2, %s10
    // Predicated region
    $region41: #{tpu_custom_call.1} parent=5 // pred_check
      %p935 = pneg %p934
    $region42: #{tpu_custom_call.1} parent=5 // pred_check_branch
      %937 = sbr.rel (%p935) target = $region44
    $region43: #{tpu_custom_call.1} parent=5 // pred_region
      %s938 = ssub.s32 %s10, 2
      // Predicated region
      $region45: #{tpu_custom_call.1} parent=43 // pred_check
        %p939 = pneg %p128
      $region46: #{tpu_custom_call.1} parent=43 // pred_check_branch
        %941 = sbr.rel (%p939) target = $region48
      $region47: #{tpu_custom_call.1} parent=43 // pred_region
        %p942 = scmp.lt.s32.totalorder %s16, 1
        %s943 = scalar_select %p942, %s16, 1
        %s944 = smul.addr %s943, 2
        %s945 = smul.addr %s944, 4
        %s946 = scalar_lea.vmem %s4, %s945
      $region48: #{tpu_custom_call.1} parent=43 // pred_fallthru
        _
    $region44: #{tpu_custom_call.1} parent=5 // pred_fallthru
      _
  $region6: #{tpu_custom_call.1} parent=0 // loop_footer
    %s14 = sadd.s32 1, %s10
  $region7: #{tpu_custom_call.1} parent=0 // loop_footer_branch
    %9 = sbr.rel target = $region3
  $region8: #{tpu_custom_call.1} parent=0 // loop_exit
    _

</llo_original>
